<compile_context>
chip_gen: v5e
topology: v5e:2x2
jax: 0.10.0
libtpu: 0.0.40
codegen_flags: <defaults>
</compile_context>

<pallas_src>
import functools

import jax
import jax.numpy as jnp
from jax.experimental import pallas as pl
from jax.experimental.pallas import tpu as pltpu


LEAKY_SLOPE = 0.2                         # nn.LeakyReLU(0.2) in the PyTorch module

_VMEM_LIMIT_BYTES = 32 * 1024 * 1024      # explicit scoped-VMEM request (safe on v5e/v6e/v7x)
_VMEM_BUDGET = 20 * 1024 * 1024           # accounted working-set target (headroom vs. limit)
_WEIGHT_CHUNK_BUDGET = 8 * 1024 * 1024    # max bytes for one resident W1 H-chunk


def _round_up(n, m):
    return ((n + m - 1) // m) * m


# ----------------------------------------------------------------------------
# Pallas kernel
#   grid = (row_tiles, h_chunks); h-chunk axis is a reduction ("arbitrary")
#   with the lane-dense (1, 1, TM) attention block resident as accumulator.
# ----------------------------------------------------------------------------
def mpool_attn_kernel(x_ref, w1_ref, b1_ref, w2_ref, att_ref):
    @pl.when(pl.program_id(1) == 0)
    def _init():
        att_ref[...] = jnp.zeros_like(att_ref)

    x = x_ref[...]                                               # (TM, Din)
    h = jnp.dot(x, w1_ref[...],
                preferred_element_type=jnp.float32) + b1_ref[...]  # (TM, TH) f32
    h = jnp.maximum(h, LEAKY_SLOPE * h)                          # LeakyReLU(0.2)
    # Width-1 projection on VPU + lane reduce (no 1-wide MXU pass); store the
    # (TM,) partial lane-dense into the resident (1, 1, TM) accumulator.
    partial = jnp.sum(h * w2_ref[...], axis=-1)                  # (TM,)
    att_ref[...] += partial[None, None, :]


# ----------------------------------------------------------------------------
# Tile selection from the real VMEM footprint
# ----------------------------------------------------------------------------
def _choose_tiles(n_rows, din, h_pad, x_itemsize):
    """Returns (TM row tile, TH hidden chunk, padded hidden dim, num_chunks)."""
    din_lane = _round_up(din, 128)            # x tile is lane-padded in VMEM

    # Hidden chunk: multiple of 128, resident W1 chunk <= budget.
    th = h_pad
    while th > 128 and din * th * x_itemsize > _WEIGHT_CHUNK_BUDGET:
        th = max(128, _round_up(th // 2, 128))
    h_pad = _round_up(h_pad, th)              # exact chunk coverage (extra zero pad)
    num_chunks = h_pad // th

    # Conservative: assume weights are double-buffered by the pipeline.
    weight_bytes = 2 * (din * th * x_itemsize + 2 * th * 4)

    # Per-row bytes: 2 pipelined x buffers (lane-padded) + f32 h working set
    # (h and h*w2) + 2 buffers of the (1, 1, TM) output block.
    per_row = 2 * din_lane * x_itemsize + 2 * th * 4 + 2 * 4
    avail = max(_VMEM_BUDGET - weight_bytes, 1 << 20)
    tm = avail // per_row
    # Target <= ~4 MiB per x buffer (review: 2-4 MiB tiles hit 85%+ of HBM roofline).
    tm = min(tm, max(8, (4 << 20) // (din_lane * x_itemsize)))
    if tm >= 128:
        tm = (tm // 128) * 128
    else:
        tm = max(8, (tm // 8) * 8)
    tm = min(tm, _round_up(n_rows, 8))
    return int(tm), int(th), int(h_pad), int(num_chunks)


# ----------------------------------------------------------------------------
# Wrapper around pallas_call
# ----------------------------------------------------------------------------
def run_attention(x2, w1t, b1, w2row, b2, *, use_bf16=False):
    """x2: (N, Din) -> attention scores (N,) = LeakyReLU(x@W1+b1) . w2 + b2."""
    n, din = x2.shape
    h = w1t.shape[1]

    compute_dtype = jnp.bfloat16 if use_bf16 else x2.dtype
    x_itemsize = jnp.dtype(compute_dtype).itemsize

    # Hidden dim zero-padded to a lane multiple (exact: LeakyReLU(0)=0, w2_pad=0).
    h_pad0 = _round_up(max(h, 1), 128)
    tm, th, h_pad, num_chunks = _choose_tiles(n, din, h_pad0, x_itemsize)

    if h_pad != h:
        w1t = jnp.pad(w1t, ((0, 0), (0, h_pad - h)))
        b1 = jnp.pad(b1, ((0, 0), (0, h_pad - h)))
        w2row = jnp.pad(w2row, ((0, 0), (0, h_pad - h)))

    if use_bf16:
        # Optional ~2x HBM-roofline win on the x read; OFF by default because
        # bf16 rounding can flip the data-dependent top-k ordering.
        x2 = x2.astype(jnp.bfloat16)
        w1t = w1t.astype(jnp.bfloat16)

    n_pad = _round_up(n, tm)
    if n_pad != n:
        x2 = jnp.pad(x2, ((0, n_pad - n), (0, 0)))
    num_row_tiles = n_pad // tm

    grid = (num_row_tiles, num_chunks)
    flops = 2 * n_pad * din * h_pad + 4 * n_pad * h_pad
    bytes_accessed = (n_pad * din * x_itemsize + n_pad * 4
                      + num_row_tiles * num_chunks * din * th * x_itemsize
                      + 2 * h_pad * 4)

    att = pl.pallas_call(
        mpool_attn_kernel,
        grid=grid,
        in_specs=[
            # x row tile: streamed / double-buffered; resident across h-chunks.
            pl.BlockSpec((tm, din), lambda i, j: (i, 0)),
            # W1 / b1 / w2 chunk: constant over row tiles (VMEM-resident).
            pl.BlockSpec((din, th), lambda i, j: (0, j)),
            pl.BlockSpec((1, th), lambda i, j: (0, j)),
            pl.BlockSpec((1, th), lambda i, j: (0, j)),
        ],
        # Lane-dense output block (rows live in lanes); resident across h-chunks.
        out_specs=pl.BlockSpec((1, 1, tm), lambda i, j: (i, 0, 0)),
        out_shape=jax.ShapeDtypeStruct((num_row_tiles, 1, tm), jnp.float32),
        compiler_params=pltpu.CompilerParams(
            # NOTE: on v7x, pltpu.CORE_PARALLEL on the row axis could shard the
            # two TensorCores explicitly; kept portable with "parallel" here.
            dimension_semantics=("parallel", "arbitrary"),
            vmem_limit_bytes=_VMEM_LIMIT_BYTES),
        cost_estimate=pl.CostEstimate(
            flops=flops, transcendentals=0, bytes_accessed=bytes_accessed),
    )(x2, w1t, b1, w2row)

    # b2 is a constant shift (cannot change top-k ordering) -> add outside the
    # kernel.  Slice padded rows off BEFORE top_k so they can never be selected.
    return att.reshape(n_pad)[:n] + b2[0, 0]


# ----------------------------------------------------------------------------
# MPoolLayer forward (selection mode)
# ----------------------------------------------------------------------------
@functools.partial(jax.jit, static_argnames=("pooling_ratio", "use_bf16"))
def mpool_selection_forward(x, params, adj=None, pooling_ratio=0.5, use_bf16=False):
    """Mirrors MPoolLayer.forward with mode='selection'.

    Returns (selected_x, adj_or_None, attention).
    """
    b, s, din = x.shape
    att = run_attention(x.reshape(b * s, din),
                        params["W1t"], params["b1"],
                        params["W2row"], params["b2"],
                        use_bf16=use_bf16).reshape(b, s)

    k = int(s * pooling_ratio)
    _, idx = jax.lax.top_k(att, k)                                # (B, k)
    selected_x = jnp.take_along_axis(x, idx[..., None], axis=1)   # (B, k, Din)

    new_adj = None
    if adj is not None:
        if adj.ndim == 2:
            adj = jnp.broadcast_to(adj[None], (b,) + adj.shape)
        rows = jnp.take_along_axis(adj, idx[:, :, None], axis=1)      # (B, k, S)
        new_adj = jnp.take_along_axis(rows, idx[:, None, :], axis=2)  # (B, k, k)

    return selected_x, new_adj, att


# ----------------------------------------------------------------------------
# Deterministic parameter init (matches MPoolLayer.__init__: xavier_uniform
# weights, zero biases).  Weights stored pre-transposed for jnp.dot.
# ----------------------------------------------------------------------------
def _xavier_t(key, fan_in, fan_out):
    lim = (6.0 / (fan_in + fan_out)) ** 0.5
    return jax.random.uniform(key, (fan_in, fan_out), jnp.float32, -lim, lim)


def init_params(key, in_dim, hidden_dim):
    k1, k2 = jax.random.split(key)
    return {
        "W1t": _xavier_t(k1, in_dim, hidden_dim),                 # (Din, H)
        "b1": jnp.zeros((1, hidden_dim), jnp.float32),
        "W2row": _xavier_t(k2, hidden_dim, 1).T,                  # (1, H)
        "b2": jnp.zeros((1, 1), jnp.float32),
    }


# ----------------------------------------------------------------------------
# Pure-JAX reference (same math, unpadded weights) for a numeric sanity check
# ----------------------------------------------------------------------------
def reference_forward(x, params, pooling_ratio=0.5):
    b, s, _ = x.shape
    h = x @ params["W1t"] + params["b1"][0]
    h = jnp.maximum(h, LEAKY_SLOPE * h)
    att = jnp.sum(h * params["W2row"][0], axis=-1) + params["b2"][0, 0]
    k = int(s * pooling_ratio)
    _, idx = jax.lax.top_k(att, k)
    sel = jnp.take_along_axis(x, idx[..., None], axis=1)
    return sel, att


# ----------------------------------------------------------------------------
if __name__ == "__main__":
    B, S = 2, 8                       # batch, num_nodes
    in_dim, hidden_dim = 16, 32
    pooling_ratio = 0.5

    key = jax.random.PRNGKey(0)
    k_x, k_p = jax.random.split(key)
    x = jax.random.normal(k_x, (B, S, in_dim), jnp.float32)
    params = init_params(k_p, in_dim, hidden_dim)

    sel, adj_out, att = mpool_selection_forward(x, params,
                                                pooling_ratio=pooling_ratio)
    jax.block_until_ready((sel, att))

    sel_ref, att_ref = reference_forward(x, params, pooling_ratio)
    k = int(S * pooling_ratio)
    assert sel.shape == (B, k, in_dim) and att.shape == (B, S)
    assert adj_out is None
    assert jnp.allclose(att, att_ref, atol=1e-4, rtol=1e-4)
    assert jnp.allclose(sel, sel_ref, atol=1e-5, rtol=1e-5)

    print("KERNEL_OK")
</pallas_src>

<mosaic_0001>
module attributes {stable_mosaic.version = 11 : i64} {
  func.func @mpool_attn_kernel(%arg0: i32, %arg1: i32, %arg2: memref<16x16xf32, #tpu.memory_space<vmem>>, %arg3: memref<16x128xf32, #tpu.memory_space<vmem>>, %arg4: memref<1x128xf32, #tpu.memory_space<vmem>>, %arg5: memref<1x128xf32, #tpu.memory_space<vmem>>, %arg6: memref<1x1x16xf32, #tpu.memory_space<vmem>>) attributes {dimension_semantics = [#tpu.dimension_semantics<parallel>, #tpu.dimension_semantics<arbitrary>], iteration_bounds = array<i64: 1, 1>, scalar_prefetch = 0 : i64, scratch_operands = 0 : i64, tpu.core_type = #tpu.core_type<tc>, window_params = [{transform_indices = @transform_0, window_bounds = array<i64: 16, 16>}, {transform_indices = @transform_1, window_bounds = array<i64: 16, 128>}, {transform_indices = @transform_2, window_bounds = array<i64: 1, 128>}, {transform_indices = @transform_3, window_bounds = array<i64: 1, 128>}, {transform_indices = @transform_4, window_bounds = array<i64: 1, 1, 16>}]} {
    %c0_i32 = arith.constant 0 : i32
    %0 = arith.cmpi eq, %arg1, %c0_i32 : i32
    %1 = arith.extui %0 : i1 to i32
    %c0_i32_0 = arith.constant 0 : i32
    %2 = arith.cmpi ne, %1, %c0_i32_0 : i32
    scf.if %2 {
      %cst_16 = arith.constant 0.000000e+00 : f32
      %20 = vector.broadcast %cst_16 : f32 to vector<1x1x16xf32>
      %c0_17 = arith.constant 0 : index
      %c0_18 = arith.constant 0 : index
      %c0_19 = arith.constant 0 : index
      %21 = vector.load %arg6[%c0_17, %c0_18, %c0_19] : memref<1x1x16xf32, #tpu.memory_space<vmem>>, vector<1x1x16xf32>
      tpu.vector_store %arg6[%c0_17, %c0_18, %c0_19], %20 {strides = array<i32>} : memref<1x1x16xf32, #tpu.memory_space<vmem>>, vector<1x1x16xf32>,
    } else {
    }
    %c0 = arith.constant 0 : index
    %c0_1 = arith.constant 0 : index
    %3 = vector.load %arg2[%c0, %c0_1] : memref<16x16xf32, #tpu.memory_space<vmem>>, vector<16x16xf32>
    %c0_2 = arith.constant 0 : index
    %c0_3 = arith.constant 0 : index
    %4 = vector.load %arg3[%c0_2, %c0_3] : memref<16x128xf32, #tpu.memory_space<vmem>>, vector<16x128xf32>
    %cst = arith.constant dense<0.000000e+00> : vector<16x128xf32>
    %5 = tpu.matmul %3, %4, %cst {dimension_numbers = #tpu.dot_dimension_numbers<[1], [0], [0], [1], [0, 0, 1, 1], [], []>} : vector<16x16xf32>, vector<16x128xf32>, vector<16x128xf32> -> vector<16x128xf32>
    %c0_4 = arith.constant 0 : index
    %c0_5 = arith.constant 0 : index
    %6 = vector.load %arg4[%c0_4, %c0_5] : memref<1x128xf32, #tpu.memory_space<vmem>>, vector<1x128xf32>
    %7 = vector.broadcast %6 : vector<1x128xf32> to vector<16x128xf32>
    %8 = arith.addf %5, %7 : vector<16x128xf32>
    %cst_6 = arith.constant 2.000000e-01 : f32
    %9 = vector.broadcast %cst_6 : f32 to vector<16x128xf32>
    %10 = arith.mulf %9, %8 : vector<16x128xf32>
    %11 = arith.maximumf %8, %10 : vector<16x128xf32>
    %c0_7 = arith.constant 0 : index
    %c0_8 = arith.constant 0 : index
    %12 = vector.load %arg5[%c0_7, %c0_8] : memref<1x128xf32, #tpu.memory_space<vmem>>, vector<1x128xf32>
    %13 = vector.broadcast %12 : vector<1x128xf32> to vector<16x128xf32>
    %14 = arith.mulf %11, %13 : vector<16x128xf32>
    %cst_9 = arith.constant dense<0.000000e+00> : vector<16xf32>
    %15 = vector.multi_reduction <add>, %14, %cst_9 [1] : vector<16x128xf32> to vector<16xf32>
    %c0_10 = arith.constant 0 : index
    %c0_11 = arith.constant 0 : index
    %c0_12 = arith.constant 0 : index
    %16 = vector.load %arg6[%c0_10, %c0_11, %c0_12] : memref<1x1x16xf32, #tpu.memory_space<vmem>>, vector<1x1x16xf32>
    %17 = vector.shape_cast %15 : vector<16xf32> to vector<1x1x16xf32>
    %18 = arith.addf %16, %17 : vector<1x1x16xf32>
    %c0_13 = arith.constant 0 : index
    %c0_14 = arith.constant 0 : index
    %c0_15 = arith.constant 0 : index
    %19 = vector.load %arg6[%c0_13, %c0_14, %c0_15] : memref<1x1x16xf32, #tpu.memory_space<vmem>>, vector<1x1x16xf32>
    tpu.vector_store %arg6[%c0_13, %c0_14, %c0_15], %18 {strides = array<i32>} : memref<1x1x16xf32, #tpu.memory_space<vmem>>, vector<1x1x16xf32>,
    return
  }
  func.func @transform_0(%arg0: i32, %arg1: i32) -> (i32, i32) {
    %c0_i32 = arith.constant 0 : i32
    %c0_i32_0 = arith.constant 0 : i32
    return %arg0, %c0_i32 : i32, i32
  }
  func.func @transform_1(%arg0: i32, %arg1: i32) -> (i32, i32) {
    %c0_i32 = arith.constant 0 : i32
    %c0_i32_0 = arith.constant 0 : i32
    return %c0_i32, %arg1 : i32, i32
  }
  func.func @transform_2(%arg0: i32, %arg1: i32) -> (i32, i32) {
    %c0_i32 = arith.constant 0 : i32
    %c0_i32_0 = arith.constant 0 : i32
    return %c0_i32, %arg1 : i32, i32
  }
  func.func @transform_3(%arg0: i32, %arg1: i32) -> (i32, i32) {
    %c0_i32 = arith.constant 0 : i32
    %c0_i32_0 = arith.constant 0 : i32
    return %c0_i32, %arg1 : i32, i32
  }
  func.func @transform_4(%arg0: i32, %arg1: i32) -> (i32, i32, i32) {
    %c0_i32 = arith.constant 0 : i32
    %c0_i32_0 = arith.constant 0 : i32
    %c0_i32_1 = arith.constant 0 : i32
    return %arg0, %c0_i32, %c0_i32_0 : i32, i32, i32
  }
}

</mosaic_0001>

<llo_original>
// kernel: mpool_selection_forward.1
$region0: #{mpool_selection_forward.1}
  #allocation0 [shape = 'u32[]', space=smem, size = 0x4, offset = 0x4, fixed_abs, tag = 'smem constant byte address 0x4 - core index']
  #allocation1 [shape = 'u32[72,128]{1,0:T(1,128)}', space=vmem, size = 0x9000, scoped, tag = 'internal scratch']
  %s0 = inlined_call_operand.vmem [shape: f32[16,16], index: 0, kind: input, shape index: {}]
  %s1 = inlined_call_operand.vmem [shape: f32[16,128], index: 1, kind: input, shape index: {}]
  %s2 = inlined_call_operand.vmem [shape: f32[1,128], index: 2, kind: input, shape index: {}]
  %s3 = inlined_call_operand.vmem [shape: f32[1,128], index: 3, kind: input, shape index: {}]
  %s4 = inlined_call_operand.vmem [shape: f32[1,1,16], index: 4, kind: output, shape index: {}]
  %s5 = sld [smem:[#allocation0]]
  $region30: #{mpool_selection_forward.1} parent=0
    _
  %s7 = ssub.s32 1, %s5
  %s8 = scalar_select 0, %s7, %s5
  // Predicated region
  $region2: #{mpool_selection_forward.1} parent=0 // pred_check
    _
  $region3: #{mpool_selection_forward.1} parent=0 // pred_check_branch
    %10 = sbr.rel (0) target = $region5
  $region4: #{mpool_selection_forward.1} parent=0 // pred_region
    _
  $region5: #{mpool_selection_forward.1} parent=0 // pred_fallthru
    _
  // Predicated region
  $region6: #{mpool_selection_forward.1} parent=0 // pred_check
    _
  $region7: #{mpool_selection_forward.1} parent=0 // pred_check_branch
    %12 = sbr.rel (0) target = $region9
  $region8: #{mpool_selection_forward.1} parent=0 // pred_region
    _
  $region9: #{mpool_selection_forward.1} parent=0 // pred_fallthru
    _
  // Predicated region
  $region10: #{mpool_selection_forward.1} parent=0 // pred_check
    _
  $region11: #{mpool_selection_forward.1} parent=0 // pred_check_branch
    %14 = sbr.rel (0) target = $region13
  $region12: #{mpool_selection_forward.1} parent=0 // pred_region
    _
  $region13: #{mpool_selection_forward.1} parent=0 // pred_fallthru
    _
  // Predicated region
  $region14: #{mpool_selection_forward.1} parent=0 // pred_check
    _
  $region15: #{mpool_selection_forward.1} parent=0 // pred_check_branch
    %16 = sbr.rel (0) target = $region17
  $region16: #{mpool_selection_forward.1} parent=0 // pred_region
    _
  $region17: #{mpool_selection_forward.1} parent=0 // pred_fallthru
    _
  %p17 = scmp.eq.s32.totalorder 0, 0
  // Predicated region
  $region18: #{mpool_selection_forward.1} parent=0 // pred_check
    %p18 = pneg %p17
  $region19: #{mpool_selection_forward.1} parent=0 // pred_check_branch
    %20 = sbr.rel (%p18) target = $region21
  $region20: #{mpool_selection_forward.1} parent=0 // pred_region
    %vm21 = vcmask 122880
    %22 = vst.msk [vmem:[%s4] sm:$0x1] %vm21, 0.0
  $region21: #{mpool_selection_forward.1} parent=0 // pred_fallthru
    _
  %v23 = vld [vmem:[%s0] sm:$0xff]
  %v24 = vld [vmem:[%s0 + $0x8] sm:$0xff]
  %v25 = vld [vmem:[%s1] sm:$0xff]
  %v26 = vld [vmem:[%s1 + $0x8] sm:$0xff]
  %v27 = vld [vmem:[%s2] sm:$0x1]
  %v29 = vperm.slane %v27, 0
  %vm31 = vcmask 130048
  %v33 = vsel %vm31, %v23, 0
  %v36 = vsel %vm31, %v24, 0
  %38 = vmatpush.msra.mxu0 0.0
  %39 = vmatpush.msra.mxu0 0.0
  %40 = vmatpush.msra.mxu0 0.0
  %41 = vmatpush.msra.mxu0 0.0
  %42 = vmatpush.msra.mxu0 0.0
  %43 = vmatpush.msra.mxu0 0.0
  %44 = vmatpush.msra.mxu0 0.0
  %45 = vmatpush.msra.mxu0 0.0
  %46 = vmatpush.msra.mxu0 0.0
  %47 = vmatpush.msra.mxu0 0.0
  %48 = vmatpush.msra.mxu0 0.0
  %49 = vmatpush.msra.mxu0 0.0
  %50 = vmatpush.msra.mxu0 0.0
  %51 = vmatpush.msra.mxu0 0.0
  %52 = vmatpush.msra.mxu0 %v26
  %53 = vmatpush.msra.mxu0 %v25
  %54 = vmatmul.f32.gmra.mxu0 %v33
  %v55 = vpop.f32.mrf.mxu0
  %v56 = vadd.f32 %v29, %v55
  %57 = vmatmul.f32.gmra.mxu0 %v36
  %v58 = vpop.f32.mrf.mxu0
  %v59 = vadd.f32 %v29, %v58
  %60 = vdwg.mxu0
  %v61 = vmul.f32 %v56, 0.2
  %v62 = vmul.f32 %v59, 0.2
  %v63 = vmax.f32 %v56, %v61
  %v64 = vmax.f32 %v59, %v62
  %v65 = vld [vmem:[%s3] sm:$0x1]
  %v67 = vperm.slane %v65, 0
  %v69 = vmul.f32 %v63, %v67
  %v70 = vmul.f32 %v64, %v67
  %71 = vadd.xlane.f32.xlu0 %v69
  %v72 = vpop.xlane.xlu0 %71
  %73 = vadd.xlane.f32.xlu0 %v70
  %v74 = vpop.xlane.xlu0 %73
  %v75 = vld [vmem:[%s4] sm:$0x1]
  %v78 = vperm.slane %v72, 0
  %v79 = vperm.slane %v72, 1
  %v80 = vperm.slane %v72, 2
  %v81 = vperm.slane %v72, 3
  %v82 = vperm.slane %v72, 4
  %v83 = vperm.slane %v72, 5
  %v84 = vperm.slane %v72, 6
  %v85 = vperm.slane %v72, 7
  %v86 = vperm.slane %v74, 0
  %v87 = vperm.slane %v74, 1
  %v88 = vperm.slane %v74, 2
  %v89 = vperm.slane %v74, 3
  %v90 = vperm.slane %v74, 4
  %v91 = vperm.slane %v74, 5
  %v92 = vperm.slane %v74, 6
  %v93 = vperm.slane %v74, 7
  %94 = vst [vmem:[#allocation1] ss:$9 sm:$0xff] %v78
  %s95 = scalar_lea.vmem [#allocation1], 1
  %96 = vst [vmem:[%s95] ss:$9 sm:$0xff] %v79
  %s97 = scalar_lea.vmem [#allocation1], 2
  %98 = vst [vmem:[%s97] ss:$9 sm:$0xff] %v80
  %s99 = scalar_lea.vmem [#allocation1], 3
  %100 = vst [vmem:[%s99] ss:$9 sm:$0xff] %v81
  %s101 = scalar_lea.vmem [#allocation1], 4
  %102 = vst [vmem:[%s101] ss:$9 sm:$0xff] %v82
  %s103 = scalar_lea.vmem [#allocation1], 5
  %104 = vst [vmem:[%s103] ss:$9 sm:$0xff] %v83
  %s105 = scalar_lea.vmem [#allocation1], 6
  %106 = vst [vmem:[%s105] ss:$9 sm:$0xff] %v84
  %s107 = scalar_lea.vmem [#allocation1], 7
  %108 = vst [vmem:[%s107] ss:$9 sm:$0xff] %v85
  %v109 = vld [vmem:[#allocation1] sm:$0xff]
  %110 = vst [vmem:[#allocation1] ss:$9 sm:$0xff] %v86
  %111 = vst [vmem:[%s95] ss:$9 sm:$0xff] %v87
  %112 = vst [vmem:[%s97] ss:$9 sm:$0xff] %v88
  %113 = vst [vmem:[%s99] ss:$9 sm:$0xff] %v89
  %114 = vst [vmem:[%s101] ss:$9 sm:$0xff] %v90
  %115 = vst [vmem:[%s103] ss:$9 sm:$0xff] %v91
  %116 = vst [vmem:[%s105] ss:$9 sm:$0xff] %v92
  %117 = vst [vmem:[%s107] ss:$9 sm:$0xff] %v93
  %v118 = vld [vmem:[#allocation1] sm:$0xff]
  %119 = vset.pattern.permute.xlu0 0
  %120 = vperm.xlu0 %119, %v109
  %v121 = vpop.permute.xlu0 %120
  %122 = vset.pattern.permute.xlu0 0
  %123 = vperm.xlu0 %122, %v118
  %v124 = vpop.permute.xlu0 %123
  %v125 = vlaneseq
  %v126 = vand.u32 %v125, 127
  %v127 = vperm.slane %v121, %v126
  %v128 = vadd.s32 %v126, 4294967288
  %v129 = vperm.slane %v124, %v128
  %vm130 = vcmask 130112
  %v131 = vsel %vm130, %v129, %v127
  %v133 = vadd.f32 %v75, %v131
  %vm134 = vcmask 122880
  %135 = vst.msk [vmem:[%s4] sm:$0x1] %vm134, %v133
  // Predicated region
  $region22: #{mpool_selection_forward.1} parent=0 // pred_check
    _
  $region23: #{mpool_selection_forward.1} parent=0 // pred_check_branch
    %137 = sbr.rel (0) target = $region25
  $region24: #{mpool_selection_forward.1} parent=0 // pred_region
    _
  $region25: #{mpool_selection_forward.1} parent=0 // pred_fallthru
    _
  // Predicated region
  $region26: #{mpool_selection_forward.1} parent=0 // pred_check
    _
  $region27: #{mpool_selection_forward.1} parent=0 // pred_check_branch
    %139 = sbr.rel (0) target = $region29
  $region28: #{mpool_selection_forward.1} parent=0 // pred_region
    _
  $region29: #{mpool_selection_forward.1} parent=0 // pred_fallthru
    _

</llo_original>
